<compile_context>
chip_gen: v5e
topology: v5e:2x2
jax: 0.10.0
libtpu: 0.0.40
codegen_flags: <defaults>
</compile_context>

<pallas_src>
import jax
import jax.numpy as jnp
from jax.experimental import pallas as pl
from jax.experimental.pallas import tpu as pltpu


def _lstm_decoder_kernel(
    x_ref,        # (B, I)        f32
    h0_ref,       # (B, L*H)      f32, lane-dense packed initial hidden
    c0_ref,       # (B, L*H)      f32, lane-dense packed initial cell
    w_ih0_ref,    # (I, 4H)       bf16, layer-0 input weights (transposed)
    w_ihr_ref,    # (L-1, H, 4H)  bf16, layers 1..L-1 input weights
    w_hh_ref,     # (L*H, L*4H)   bf16, block-diagonal recurrent weights
    b_ref,        # (L, 1, 4H)    f32, pre-summed b_ih + b_hh
    w_fc_ref,     # (H, P)        bf16, fc weight lane-padded to P (mult of 128)
    b_fc_ref,     # (1, P)        f32
    out_ref,      # (B, P)        f32, lane-dense fc output (wrapper slices :I)
    hn_ref,       # (B, L*H)      f32, packed h_n
    cn_ref,       # (B, L*H)      f32, packed c_n
):
    B = x_ref.shape[0]
    L = b_ref.shape[0]
    H = h0_ref.shape[1] // L
    G = 4 * H                                            # gate width per layer

    # ---- hoisted off the serial per-layer chain ---------------------------
    # Recurrent part for ALL layers in one block-diagonal MXU matmul:
    #   hh_all[:, l*G:(l+1)*G] == h0[l] @ W_hh[l]
    hh_all = jnp.dot(h0_ref[...].astype(jnp.bfloat16), w_hh_ref[...],
                     preferred_element_type=jnp.float32)        # (B, L*4H)
    c0_all = c0_ref[...]                                        # (B, L*H)

    # Single-tanh activation constants (hoisted; no per-layer iota):
    #   sigmoid(x) = 0.5 * (tanh(0.5 * x) + 1)  on i/f/o lanes
    #   tanh(x)                                  on g lanes
    lane = jax.lax.broadcasted_iota(jnp.int32, (B, G), 1)
    is_g = (lane >= 2 * H) & (lane < 3 * H)
    pre = jnp.where(is_g, 1.0, 0.5).astype(jnp.float32)    # pre-scale
    post = pre                                              # post-scale
    shift = jnp.where(is_g, 0.0, 0.5).astype(jnp.float32)  # post-shift

    layer_in = x_ref[...]                                   # (B, I) f32
    h_out, c_out = [], []

    for l in range(L):                                      # static unroll
        w_ih = w_ih0_ref[...] if l == 0 else w_ihr_ref[l - 1]
        gates = (
            jnp.dot(layer_in.astype(jnp.bfloat16), w_ih,
                    preferred_element_type=jnp.float32)     # (B, 4H)
            + hh_all[:, l * G:(l + 1) * G]
            + b_ref[l]
        )
        # one EUP tanh pass over the whole 128-lane gates vreg
        act = jnp.tanh(gates * pre) * post + shift

        i_g = act[:, 0 * H:1 * H]
        f_g = act[:, 1 * H:2 * H]
        g_g = act[:, 2 * H:3 * H]
        o_g = act[:, 3 * H:4 * H]

        c_new = f_g * c0_all[:, l * H:(l + 1) * H] + i_g * g_g
        h_new = o_g * jnp.tanh(c_new)

        h_out.append(h_new)
        c_out.append(c_new)
        layer_in = h_new                                    # feeds next layer

    # lane-dense packed stores (one unmasked 128-lane store per tensor)
    hn_ref[...] = jnp.concatenate(h_out, axis=1)            # (B, L*H)
    cn_ref[...] = jnp.concatenate(c_out, axis=1)            # (B, L*H)

    # fc on the last layer's hidden state; output lane-padded to P
    out_ref[...] = (
        jnp.dot(layer_in.astype(jnp.bfloat16), w_fc_ref[...],
                preferred_element_type=jnp.float32)
        + b_fc_ref[...]
    )


def lstm_decoder_forward(x, h0, c0, kparams):
    """Runs the decoder forward pass. Returns (output, (h_n, c_n))."""
    B, I = x.shape
    L, _, H = h0.shape
    P = kparams["w_fc_pad"].shape[1]            # lane-padded fc width (128)
    G = 4 * H

    # lane-dense (B, L*H) = (8, 128) packing of the initial states
    h0_p = jnp.transpose(h0, (1, 0, 2)).reshape(B, L * H)
    c0_p = jnp.transpose(c0, (1, 0, 2)).reshape(B, L * H)

    out_shapes = (
        jax.ShapeDtypeStruct((B, P), jnp.float32),        # padded fc output
        jax.ShapeDtypeStruct((B, L * H), jnp.float32),    # packed h_n
        jax.ShapeDtypeStruct((B, L * H), jnp.float32),    # packed c_n
    )

    vmem = pl.BlockSpec(memory_space=pltpu.MemorySpace.VMEM)

    flops = (2 * B * (L * H) * (L * G)          # block-diag recurrent matmul
             + 2 * B * I * G                    # layer-0 input matmul
             + (L - 1) * 2 * B * H * G          # layers 1..L-1 input matmuls
             + 2 * B * H * P)                   # fc
    transcendentals = L * (B * G + B * H)       # one gates tanh + one cell tanh

    ins = (x, h0_p, c0_p,
           kparams["w_ih0"], kparams["w_ih_rest"], kparams["w_hh_bd"],
           kparams["b"], kparams["w_fc_pad"], kparams["b_fc_pad"])
    bytes_accessed = (sum(a.size * a.dtype.itemsize for a in ins)
                      + 4 * (B * P + 2 * B * L * H))

    out_p, hn_p, cn_p = pl.pallas_call(
        _lstm_decoder_kernel,
        out_shape=out_shapes,
        in_specs=[vmem] * len(ins),
        out_specs=(vmem, vmem, vmem),
        cost_estimate=pl.CostEstimate(
            flops=flops,
            transcendentals=transcendentals,
            bytes_accessed=bytes_accessed,
        ),
    )(*ins)

    output = out_p[:, :I]
    h_n = jnp.transpose(hn_p.reshape(B, L, H), (1, 0, 2))
    c_n = jnp.transpose(cn_p.reshape(B, L, H), (1, 0, 2))
    return output, (h_n, c_n)


def init_params(key, input_size, hidden_size, num_layers):
    """Deterministic parameter init matching nn.LSTM / nn.Linear shapes,
    stored pre-transposed for right-multiplication (logical layout, f32)."""
    H, I, L = hidden_size, input_size, num_layers
    bound = 1.0 / jnp.sqrt(jnp.float32(H))
    ks = jax.random.split(key, 8)

    def u(k, shape):
        return jax.random.uniform(k, shape, jnp.float32, -bound, bound)

    return {
        # layer 0: (4H, I) in torch -> stored as (I, 4H)
        "w_ih0": u(ks[0], (I, 4 * H)),
        # layers 1..L-1: (4H, H) in torch -> (L-1, H, 4H)
        "w_ih_rest": u(ks[1], (L - 1, H, 4 * H)),
        # all layers: (4H, H) in torch -> (L, H, 4H)
        "w_hh": u(ks[2], (L, H, 4 * H)),
        "b_ih": u(ks[3], (L, 1, 4 * H)),
        "b_hh": u(ks[4], (L, 1, 4 * H)),
        # fc: (I, H) in torch -> (H, I)
        "w_fc": u(ks[5], (H, I)),
        "b_fc": u(ks[6], (1, I)),
    }


def pack_params(p):
    """Fuse / pad logical params into the kernel-ready layout (bf16 weights,
    f32 biases)."""
    I, G = p["w_ih0"].shape
    Lm1, H, _ = p["w_ih_rest"].shape
    L = Lm1 + 1

    # block-diagonal recurrent weight: (L*H, L*4H); one MXU matmul covers the
    # h0[l] @ W_hh[l] contribution of every layer.
    w_hh_bd = jnp.zeros((L * H, L * G), jnp.float32)
    for l in range(L):
        w_hh_bd = w_hh_bd.at[l * H:(l + 1) * H, l * G:(l + 1) * G].set(
            p["w_hh"][l])

    # pre-summed bias (kept f32)
    b = p["b_ih"] + p["b_hh"]

    # fc weight / bias lane-padded to a multiple of 128 for an unmasked store
    I_out = p["w_fc"].shape[1]
    P = max(128, ((I_out + 127) // 128) * 128)
    w_fc_pad = jnp.pad(p["w_fc"], ((0, 0), (0, P - I_out)))
    b_fc_pad = jnp.pad(p["b_fc"], ((0, 0), (0, P - I_out)))

    return {
        "w_ih0": p["w_ih0"].astype(jnp.bfloat16),
        "w_ih_rest": p["w_ih_rest"].astype(jnp.bfloat16),
        "w_hh_bd": w_hh_bd.astype(jnp.bfloat16),
        "b": b,
        "w_fc_pad": w_fc_pad.astype(jnp.bfloat16),
        "b_fc_pad": b_fc_pad,
    }


def _reference_forward(x, h0, c0, p, weight_dtype=jnp.float32):
    """Plain-JAX reference. weight_dtype=bfloat16 reproduces the kernel's
    matmul precision exactly; float32 is the full-precision semantic check."""
    L, _, H = h0.shape

    def mm(a, w):
        return jnp.dot(a.astype(weight_dtype), w.astype(weight_dtype),
                       preferred_element_type=jnp.float32)

    layer_in = x
    hn, cn = [], []
    for l in range(L):
        w_ih = p["w_ih0"] if l == 0 else p["w_ih_rest"][l - 1]
        gates = (mm(layer_in, w_ih) + mm(h0[l], p["w_hh"][l])
                 + p["b_ih"][l] + p["b_hh"][l])
        i_g = jax.nn.sigmoid(gates[:, 0 * H:1 * H])
        f_g = jax.nn.sigmoid(gates[:, 1 * H:2 * H])
        g_g = jnp.tanh(gates[:, 2 * H:3 * H])
        o_g = jax.nn.sigmoid(gates[:, 3 * H:4 * H])
        c_new = f_g * c0[l] + i_g * g_g
        h_new = o_g * jnp.tanh(c_new)
        hn.append(h_new)
        cn.append(c_new)
        layer_in = h_new
    out = mm(layer_in, p["w_fc"]) + p["b_fc"]
    return out, (jnp.stack(hn), jnp.stack(cn))


if __name__ == "__main__":
    B, I, H, L = 8, 16, 32, 4   # batch, input_size, hidden_size, num_layers

    key = jax.random.PRNGKey(0)
    k_x, k_h, k_c, k_p = jax.random.split(key, 4)

    x = jax.random.normal(k_x, (B, I), jnp.float32)
    h0 = jax.random.normal(k_h, (L, B, H), jnp.float32)
    c0 = jax.random.normal(k_c, (L, B, H), jnp.float32)

    params = init_params(k_p, I, H, L)          # logical (torch-like) params
    kparams = pack_params(params)               # fused / padded kernel params

    out, (h_n, c_n) = jax.block_until_ready(
        jax.jit(lstm_decoder_forward)(x, h0, c0, kparams)
    )

    # exactness check vs a reference using the kernel's bf16 matmul precision
    ref_out, (ref_h, ref_c) = _reference_forward(x, h0, c0, params,
                                                 jnp.bfloat16)
    assert jnp.allclose(out, ref_out, atol=1e-4, rtol=1e-4)
    assert jnp.allclose(h_n, ref_h, atol=1e-4, rtol=1e-4)
    assert jnp.allclose(c_n, ref_c, atol=1e-4, rtol=1e-4)

    # semantic sanity vs the full-f32 (torch-equivalent) reference
    f32_out, (f32_h, f32_c) = _reference_forward(x, h0, c0, params,
                                                 jnp.float32)
    assert jnp.allclose(out, f32_out, atol=5e-2)
    assert jnp.allclose(h_n, f32_h, atol=5e-2)
    assert jnp.allclose(c_n, f32_c, atol=5e-2)

    print("KERNEL_OK")
</pallas_src>

<mosaic_0001>
module attributes {stable_mosaic.version = 11 : i64} {
  func.func @_lstm_decoder_kernel(%arg0: memref<8x16xf32, #tpu.memory_space<vmem>>, %arg1: memref<8x128xf32, #tpu.memory_space<vmem>>, %arg2: memref<8x128xf32, #tpu.memory_space<vmem>>, %arg3: memref<16x128xbf16, #tpu.memory_space<vmem>>, %arg4: memref<3x32x128xbf16, #tpu.memory_space<vmem>>, %arg5: memref<128x512xbf16, #tpu.memory_space<vmem>>, %arg6: memref<4x1x128xf32, #tpu.memory_space<vmem>>, %arg7: memref<32x128xbf16, #tpu.memory_space<vmem>>, %arg8: memref<1x128xf32, #tpu.memory_space<vmem>>, %arg9: memref<8x128xf32, #tpu.memory_space<vmem>>, %arg10: memref<8x128xf32, #tpu.memory_space<vmem>>, %arg11: memref<8x128xf32, #tpu.memory_space<vmem>>) attributes {dimension_semantics = [], scalar_prefetch = 0 : i64, scratch_operands = 0 : i64, tpu.core_type = #tpu.core_type<tc>} {
    %c0 = arith.constant 0 : index
    %c0_0 = arith.constant 0 : index
    %0 = vector.load %arg1[%c0, %c0_0] : memref<8x128xf32, #tpu.memory_space<vmem>>, vector<8x128xf32>
    %1 = arith.truncf %0 : vector<8x128xf32> to vector<8x128xbf16>
    %c0_1 = arith.constant 0 : index
    %c0_2 = arith.constant 0 : index
    %2 = vector.load %arg5[%c0_1, %c0_2] : memref<128x512xbf16, #tpu.memory_space<vmem>>, vector<128x512xbf16>
    %cst = arith.constant dense<0.000000e+00> : vector<8x512xf32>
    %3 = tpu.matmul %1, %2, %cst {dimension_numbers = #tpu.dot_dimension_numbers<[1], [0], [0], [1], [0, 0, 1, 1], [], []>} : vector<8x128xbf16>, vector<128x512xbf16>, vector<8x512xf32> -> vector<8x512xf32>
    %c0_3 = arith.constant 0 : index
    %c0_4 = arith.constant 0 : index
    %4 = vector.load %arg2[%c0_3, %c0_4] : memref<8x128xf32, #tpu.memory_space<vmem>>, vector<8x128xf32>
    %5 = tpu.iota {dimensions = array<i32: 1>} : vector<8x128xi32>
    %c64_i32 = arith.constant 64 : i32
    %6 = vector.broadcast %c64_i32 : i32 to vector<8x128xi32>
    %7 = arith.cmpi sge, %5, %6 : vector<8x128xi32>
    %c96_i32 = arith.constant 96 : i32
    %8 = vector.broadcast %c96_i32 : i32 to vector<8x128xi32>
    %9 = arith.cmpi slt, %5, %8 : vector<8x128xi32>
    %10 = arith.andi %7, %9 : vector<8x128xi1>
    %cst_5 = arith.constant 1.000000e+00 : f32
    %cst_6 = arith.constant 5.000000e-01 : f32
    %11 = vector.broadcast %cst_5 : f32 to vector<8x128xf32>
    %12 = vector.broadcast %cst_6 : f32 to vector<8x128xf32>
    %13 = arith.select %10, %11, %12 : vector<8x128xi1>, vector<8x128xf32>
    %cst_7 = arith.constant 0.000000e+00 : f32
    %cst_8 = arith.constant 5.000000e-01 : f32
    %14 = vector.broadcast %cst_7 : f32 to vector<8x128xf32>
    %15 = vector.broadcast %cst_8 : f32 to vector<8x128xf32>
    %16 = arith.select %10, %14, %15 : vector<8x128xi1>, vector<8x128xf32>
    %c0_9 = arith.constant 0 : index
    %c0_10 = arith.constant 0 : index
    %17 = vector.load %arg0[%c0_9, %c0_10] : memref<8x16xf32, #tpu.memory_space<vmem>>, vector<8x16xf32>
    %c0_11 = arith.constant 0 : index
    %c0_12 = arith.constant 0 : index
    %18 = vector.load %arg3[%c0_11, %c0_12] : memref<16x128xbf16, #tpu.memory_space<vmem>>, vector<16x128xbf16>
    %19 = arith.truncf %17 : vector<8x16xf32> to vector<8x16xbf16>
    %cst_13 = arith.constant dense<0.000000e+00> : vector<8x128xf32>
    %20 = tpu.matmul %19, %18, %cst_13 {dimension_numbers = #tpu.dot_dimension_numbers<[1], [0], [0], [1], [0, 0, 1, 1], [], []>} : vector<8x16xbf16>, vector<16x128xbf16>, vector<8x128xf32> -> vector<8x128xf32>
    %21 = vector.extract_strided_slice %3 {offsets = [0, 0], sizes = [8, 128], strides = [1, 1]} : vector<8x512xf32> to vector<8x128xf32>
    %22 = arith.addf %20, %21 : vector<8x128xf32>
    %c0_14 = arith.constant 0 : index
    %c0_15 = arith.constant 0 : index
    %c0_16 = arith.constant 0 : index
    %23 = vector.load %arg6[%c0_14, %c0_15, %c0_16] : memref<4x1x128xf32, #tpu.memory_space<vmem>>, vector<1x1x128xf32>
    %24 = vector.shape_cast %23 : vector<1x1x128xf32> to vector<1x128xf32>
    %25 = vector.broadcast %24 : vector<1x128xf32> to vector<8x128xf32>
    %26 = arith.addf %22, %25 : vector<8x128xf32>
    %27 = arith.mulf %26, %13 : vector<8x128xf32>
    %28 = math.tanh %27 : vector<8x128xf32>
    %29 = arith.mulf %28, %13 : vector<8x128xf32>
    %30 = arith.addf %29, %16 : vector<8x128xf32>
    %31 = vector.extract_strided_slice %30 {offsets = [0, 0], sizes = [8, 32], strides = [1, 1]} : vector<8x128xf32> to vector<8x32xf32>
    %32 = vector.extract_strided_slice %30 {offsets = [0, 32], sizes = [8, 32], strides = [1, 1]} : vector<8x128xf32> to vector<8x32xf32>
    %33 = vector.extract_strided_slice %30 {offsets = [0, 64], sizes = [8, 32], strides = [1, 1]} : vector<8x128xf32> to vector<8x32xf32>
    %34 = vector.extract_strided_slice %30 {offsets = [0, 96], sizes = [8, 32], strides = [1, 1]} : vector<8x128xf32> to vector<8x32xf32>
    %35 = vector.extract_strided_slice %4 {offsets = [0, 0], sizes = [8, 32], strides = [1, 1]} : vector<8x128xf32> to vector<8x32xf32>
    %36 = arith.mulf %32, %35 : vector<8x32xf32>
    %37 = arith.mulf %31, %33 : vector<8x32xf32>
    %38 = arith.addf %36, %37 : vector<8x32xf32>
    %39 = math.tanh %38 : vector<8x32xf32>
    %40 = arith.mulf %34, %39 : vector<8x32xf32>
    %c0_17 = arith.constant 0 : index
    %c0_18 = arith.constant 0 : index
    %c0_19 = arith.constant 0 : index
    %41 = vector.load %arg4[%c0_17, %c0_18, %c0_19] : memref<3x32x128xbf16, #tpu.memory_space<vmem>>, vector<1x32x128xbf16>
    %42 = vector.shape_cast %41 : vector<1x32x128xbf16> to vector<32x128xbf16>
    %43 = arith.truncf %40 : vector<8x32xf32> to vector<8x32xbf16>
    %cst_20 = arith.constant dense<0.000000e+00> : vector<8x128xf32>
    %44 = tpu.matmul %43, %42, %cst_20 {dimension_numbers = #tpu.dot_dimension_numbers<[1], [0], [0], [1], [0, 0, 1, 1], [], []>} : vector<8x32xbf16>, vector<32x128xbf16>, vector<8x128xf32> -> vector<8x128xf32>
    %45 = vector.extract_strided_slice %3 {offsets = [0, 128], sizes = [8, 128], strides = [1, 1]} : vector<8x512xf32> to vector<8x128xf32>
    %46 = arith.addf %44, %45 : vector<8x128xf32>
    %c1 = arith.constant 1 : index
    %c0_21 = arith.constant 0 : index
    %c0_22 = arith.constant 0 : index
    %47 = vector.load %arg6[%c1, %c0_21, %c0_22] : memref<4x1x128xf32, #tpu.memory_space<vmem>>, vector<1x1x128xf32>
    %48 = vector.shape_cast %47 : vector<1x1x128xf32> to vector<1x128xf32>
    %49 = vector.broadcast %48 : vector<1x128xf32> to vector<8x128xf32>
    %50 = arith.addf %46, %49 : vector<8x128xf32>
    %51 = arith.mulf %50, %13 : vector<8x128xf32>
    %52 = math.tanh %51 : vector<8x128xf32>
    %53 = arith.mulf %52, %13 : vector<8x128xf32>
    %54 = arith.addf %53, %16 : vector<8x128xf32>
    %55 = vector.extract_strided_slice %54 {offsets = [0, 0], sizes = [8, 32], strides = [1, 1]} : vector<8x128xf32> to vector<8x32xf32>
    %56 = vector.extract_strided_slice %54 {offsets = [0, 32], sizes = [8, 32], strides = [1, 1]} : vector<8x128xf32> to vector<8x32xf32>
    %57 = vector.extract_strided_slice %54 {offsets = [0, 64], sizes = [8, 32], strides = [1, 1]} : vector<8x128xf32> to vector<8x32xf32>
    %58 = vector.extract_strided_slice %54 {offsets = [0, 96], sizes = [8, 32], strides = [1, 1]} : vector<8x128xf32> to vector<8x32xf32>
    %59 = vector.extract_strided_slice %4 {offsets = [0, 32], sizes = [8, 32], strides = [1, 1]} : vector<8x128xf32> to vector<8x32xf32>
    %60 = arith.mulf %56, %59 : vector<8x32xf32>
    %61 = arith.mulf %55, %57 : vector<8x32xf32>
    %62 = arith.addf %60, %61 : vector<8x32xf32>
    %63 = math.tanh %62 : vector<8x32xf32>
    %64 = arith.mulf %58, %63 : vector<8x32xf32>
    %c1_23 = arith.constant 1 : index
    %c0_24 = arith.constant 0 : index
    %c0_25 = arith.constant 0 : index
    %65 = vector.load %arg4[%c1_23, %c0_24, %c0_25] : memref<3x32x128xbf16, #tpu.memory_space<vmem>>, vector<1x32x128xbf16>
    %66 = vector.shape_cast %65 : vector<1x32x128xbf16> to vector<32x128xbf16>
    %67 = arith.truncf %64 : vector<8x32xf32> to vector<8x32xbf16>
    %cst_26 = arith.constant dense<0.000000e+00> : vector<8x128xf32>
    %68 = tpu.matmul %67, %66, %cst_26 {dimension_numbers = #tpu.dot_dimension_numbers<[1], [0], [0], [1], [0, 0, 1, 1], [], []>} : vector<8x32xbf16>, vector<32x128xbf16>, vector<8x128xf32> -> vector<8x128xf32>
    %69 = vector.extract_strided_slice %3 {offsets = [0, 256], sizes = [8, 128], strides = [1, 1]} : vector<8x512xf32> to vector<8x128xf32>
    %70 = arith.addf %68, %69 : vector<8x128xf32>
    %c2 = arith.constant 2 : index
    %c0_27 = arith.constant 0 : index
    %c0_28 = arith.constant 0 : index
    %71 = vector.load %arg6[%c2, %c0_27, %c0_28] : memref<4x1x128xf32, #tpu.memory_space<vmem>>, vector<1x1x128xf32>
    %72 = vector.shape_cast %71 : vector<1x1x128xf32> to vector<1x128xf32>
    %73 = vector.broadcast %72 : vector<1x128xf32> to vector<8x128xf32>
    %74 = arith.addf %70, %73 : vector<8x128xf32>
    %75 = arith.mulf %74, %13 : vector<8x128xf32>
    %76 = math.tanh %75 : vector<8x128xf32>
    %77 = arith.mulf %76, %13 : vector<8x128xf32>
    %78 = arith.addf %77, %16 : vector<8x128xf32>
    %79 = vector.extract_strided_slice %78 {offsets = [0, 0], sizes = [8, 32], strides = [1, 1]} : vector<8x128xf32> to vector<8x32xf32>
    %80 = vector.extract_strided_slice %78 {offsets = [0, 32], sizes = [8, 32], strides = [1, 1]} : vector<8x128xf32> to vector<8x32xf32>
    %81 = vector.extract_strided_slice %78 {offsets = [0, 64], sizes = [8, 32], strides = [1, 1]} : vector<8x128xf32> to vector<8x32xf32>
    %82 = vector.extract_strided_slice %78 {offsets = [0, 96], sizes = [8, 32], strides = [1, 1]} : vector<8x128xf32> to vector<8x32xf32>
    %83 = vector.extract_strided_slice %4 {offsets = [0, 64], sizes = [8, 32], strides = [1, 1]} : vector<8x128xf32> to vector<8x32xf32>
    %84 = arith.mulf %80, %83 : vector<8x32xf32>
    %85 = arith.mulf %79, %81 : vector<8x32xf32>
    %86 = arith.addf %84, %85 : vector<8x32xf32>
    %87 = math.tanh %86 : vector<8x32xf32>
    %88 = arith.mulf %82, %87 : vector<8x32xf32>
    %c2_29 = arith.constant 2 : index
    %c0_30 = arith.constant 0 : index
    %c0_31 = arith.constant 0 : index
    %89 = vector.load %arg4[%c2_29, %c0_30, %c0_31] : memref<3x32x128xbf16, #tpu.memory_space<vmem>>, vector<1x32x128xbf16>
    %90 = vector.shape_cast %89 : vector<1x32x128xbf16> to vector<32x128xbf16>
    %91 = arith.truncf %88 : vector<8x32xf32> to vector<8x32xbf16>
    %cst_32 = arith.constant dense<0.000000e+00> : vector<8x128xf32>
    %92 = tpu.matmul %91, %90, %cst_32 {dimension_numbers = #tpu.dot_dimension_numbers<[1], [0], [0], [1], [0, 0, 1, 1], [], []>} : vector<8x32xbf16>, vector<32x128xbf16>, vector<8x128xf32> -> vector<8x128xf32>
    %93 = vector.extract_strided_slice %3 {offsets = [0, 384], sizes = [8, 128], strides = [1, 1]} : vector<8x512xf32> to vector<8x128xf32>
    %94 = arith.addf %92, %93 : vector<8x128xf32>
    %c3 = arith.constant 3 : index
    %c0_33 = arith.constant 0 : index
    %c0_34 = arith.constant 0 : index
    %95 = vector.load %arg6[%c3, %c0_33, %c0_34] : memref<4x1x128xf32, #tpu.memory_space<vmem>>, vector<1x1x128xf32>
    %96 = vector.shape_cast %95 : vector<1x1x128xf32> to vector<1x128xf32>
    %97 = vector.broadcast %96 : vector<1x128xf32> to vector<8x128xf32>
    %98 = arith.addf %94, %97 : vector<8x128xf32>
    %99 = arith.mulf %98, %13 : vector<8x128xf32>
    %100 = math.tanh %99 : vector<8x128xf32>
    %101 = arith.mulf %100, %13 : vector<8x128xf32>
    %102 = arith.addf %101, %16 : vector<8x128xf32>
    %103 = vector.extract_strided_slice %102 {offsets = [0, 0], sizes = [8, 32], strides = [1, 1]} : vector<8x128xf32> to vector<8x32xf32>
    %104 = vector.extract_strided_slice %102 {offsets = [0, 32], sizes = [8, 32], strides = [1, 1]} : vector<8x128xf32> to vector<8x32xf32>
    %105 = vector.extract_strided_slice %102 {offsets = [0, 64], sizes = [8, 32], strides = [1, 1]} : vector<8x128xf32> to vector<8x32xf32>
    %106 = vector.extract_strided_slice %102 {offsets = [0, 96], sizes = [8, 32], strides = [1, 1]} : vector<8x128xf32> to vector<8x32xf32>
    %107 = vector.extract_strided_slice %4 {offsets = [0, 96], sizes = [8, 32], strides = [1, 1]} : vector<8x128xf32> to vector<8x32xf32>
    %108 = arith.mulf %104, %107 : vector<8x32xf32>
    %109 = arith.mulf %103, %105 : vector<8x32xf32>
    %110 = arith.addf %108, %109 : vector<8x32xf32>
    %111 = math.tanh %110 : vector<8x32xf32>
    %112 = arith.mulf %106, %111 : vector<8x32xf32>
    %113 = tpu.concatenate %40, %64, %88, %112 in 1 : vector<8x32xf32>, vector<8x32xf32>, vector<8x32xf32>, vector<8x32xf32> -> vector<8x128xf32>
    %c0_35 = arith.constant 0 : index
    %c0_36 = arith.constant 0 : index
    %114 = vector.load %arg10[%c0_35, %c0_36] : memref<8x128xf32, #tpu.memory_space<vmem>>, vector<8x128xf32>
    tpu.vector_store %arg10[%c0_35, %c0_36], %113 {strides = array<i32>} : memref<8x128xf32, #tpu.memory_space<vmem>>, vector<8x128xf32>,
    %115 = tpu.concatenate %38, %62, %86, %110 in 1 : vector<8x32xf32>, vector<8x32xf32>, vector<8x32xf32>, vector<8x32xf32> -> vector<8x128xf32>
    %c0_37 = arith.constant 0 : index
    %c0_38 = arith.constant 0 : index
    %116 = vector.load %arg11[%c0_37, %c0_38] : memref<8x128xf32, #tpu.memory_space<vmem>>, vector<8x128xf32>
    tpu.vector_store %arg11[%c0_37, %c0_38], %115 {strides = array<i32>} : memref<8x128xf32, #tpu.memory_space<vmem>>, vector<8x128xf32>,
    %117 = arith.truncf %112 : vector<8x32xf32> to vector<8x32xbf16>
    %c0_39 = arith.constant 0 : index
    %c0_40 = arith.constant 0 : index
    %118 = vector.load %arg7[%c0_39, %c0_40] : memref<32x128xbf16, #tpu.memory_space<vmem>>, vector<32x128xbf16>
    %cst_41 = arith.constant dense<0.000000e+00> : vector<8x128xf32>
    %119 = tpu.matmul %117, %118, %cst_41 {dimension_numbers = #tpu.dot_dimension_numbers<[1], [0], [0], [1], [0, 0, 1, 1], [], []>} : vector<8x32xbf16>, vector<32x128xbf16>, vector<8x128xf32> -> vector<8x128xf32>
    %c0_42 = arith.constant 0 : index
    %c0_43 = arith.constant 0 : index
    %120 = vector.load %arg8[%c0_42, %c0_43] : memref<1x128xf32, #tpu.memory_space<vmem>>, vector<1x128xf32>
    %121 = vector.broadcast %120 : vector<1x128xf32> to vector<8x128xf32>
    %122 = arith.addf %119, %121 : vector<8x128xf32>
    %c0_44 = arith.constant 0 : index
    %c0_45 = arith.constant 0 : index
    %123 = vector.load %arg9[%c0_44, %c0_45] : memref<8x128xf32, #tpu.memory_space<vmem>>, vector<8x128xf32>
    tpu.vector_store %arg9[%c0_44, %c0_45], %122 {strides = array<i32>} : memref<8x128xf32, #tpu.memory_space<vmem>>, vector<8x128xf32>,
    return
  }
}

</mosaic_0001>

<llo_original>
// kernel: lstm_decoder_forward.1
$region0: #{lstm_decoder_forward.1}
  #allocation0 [shape = 'u32[]', space=smem, size = 0x4, offset = 0x4, fixed_abs, tag = 'smem constant byte address 0x4 - core index']
  #allocation1 [shape = 'u32[72,128]{1,0:T(1,128)}', space=vmem, size = 0x9000, scoped, tag = 'internal scratch']
  %s0 = inlined_call_operand.vmem [shape: f32[8,16], index: 0, kind: input, shape index: {}]
  %s1 = inlined_call_operand.vmem [shape: f32[8,128], index: 1, kind: input, shape index: {}]
  %s2 = inlined_call_operand.vmem [shape: f32[8,128], index: 2, kind: input, shape index: {}]
  %s3 = inlined_call_operand.vmem [shape: bf16[16,128], index: 3, kind: input, shape index: {}]
  %s4 = inlined_call_operand.vmem [shape: bf16[3,32,128], index: 4, kind: input, shape index: {}]
  %s5 = inlined_call_operand.hbm [shape: bf16[128,512], index: 5, kind: input, shape index: {}]
  %s6 = inlined_call_operand.vmem [shape: f32[4,1,128], index: 6, kind: input, shape index: {}]
  %s7 = inlined_call_operand.vmem [shape: bf16[32,128], index: 7, kind: input, shape index: {}]
  %s8 = inlined_call_operand.vmem [shape: f32[1,128], index: 8, kind: input, shape index: {}]
  %s9 = inlined_call_operand.hbm [shape: f32[8,128], index: 9, kind: output, shape index: {0}]
  %s10 = inlined_call_operand.vmem [shape: f32[8,128], index: 10, kind: output, shape index: {1}]
  %s11 = inlined_call_operand.vmem [shape: f32[8,128], index: 11, kind: output, shape index: {2}]
  %12 = xla_tuple %s9, %s10, %s11
  %s13 = sld [smem:[#allocation0]]
  $region66: #{lstm_decoder_forward.1} parent=0
    _
  %s15 = ssub.s32 1, %s13
  %s16 = scalar_select 0, %s15, %s13
  $region1: #{lstm_decoder_forward.1} parent=0
    #allocation2 [shape = 'u8[131072]{0}', space=vmem, size = 0x20000, scoped, tag = 'input window, operand 5, single buffered']
    #allocation3 [shape = 's32[1]{0}', space=sflag, size = 0x4, scoped, tag = 'scoped memory for lstm_decoder_forward.1']
    #allocation4 [shape = 's32[1]{0}', space=sflag, size = 0x4, scoped, tag = 'scoped memory for lstm_decoder_forward.1']
    #allocation5 [shape = 'u8[4096]{0}', space=vmem, size = 0x1000, scoped, tag = 'output window, operand 0, single buffered']
    %17 = vsyncpa [#allocation3], 0
    %18 = vsyncpa [#allocation4], 0
    // Predicated region
    $region2: #{lstm_decoder_forward.1} parent=1 // pred_check
      _
    $region3: #{lstm_decoder_forward.1} parent=1 // pred_check_branch
      %20 = sbr.rel (0) target = $region5
    $region4: #{lstm_decoder_forward.1} parent=1 // pred_region
      _
    $region5: #{lstm_decoder_forward.1} parent=1 // pred_fallthru
      _
    // Predicated region
    $region6: #{lstm_decoder_forward.1} parent=1 // pred_check
      _
    $region7: #{lstm_decoder_forward.1} parent=1 // pred_check_branch
      %22 = sbr.rel (0) target = $region9
    $region8: #{lstm_decoder_forward.1} parent=1 // pred_region
      _
    $region9: #{lstm_decoder_forward.1} parent=1 // pred_fallthru
      _
    // Predicated region
    $region10: #{lstm_decoder_forward.1} parent=1 // pred_check
      _
    $region11: #{lstm_decoder_forward.1} parent=1 // pred_check_branch
      %24 = sbr.rel (0) target = $region13
    $region12: #{lstm_decoder_forward.1} parent=1 // pred_region
      _
    $region13: #{lstm_decoder_forward.1} parent=1 // pred_fallthru
      _
    // Predicated region
    $region14: #{lstm_decoder_forward.1} parent=1 // pred_check
      _
    $region15: #{lstm_decoder_forward.1} parent=1 // pred_check_branch
      %26 = sbr.rel (0) target = $region17
    $region16: #{lstm_decoder_forward.1} parent=1 // pred_region
      _
    $region17: #{lstm_decoder_forward.1} parent=1 // pred_fallthru
      _
    // Predicated region
    $region18: #{lstm_decoder_forward.1} parent=1 // pred_check
      _
    $region19: #{lstm_decoder_forward.1} parent=1 // pred_check_branch
      %28 = sbr.rel (0) target = $region21
    $region20: #{lstm_decoder_forward.1} parent=1 // pred_region
      _
    $region21: #{lstm_decoder_forward.1} parent=1 // pred_fallthru
      _
    // Predicated region
    $region22: #{lstm_decoder_forward.1} parent=1 // pred_check
      _
    $region23: #{lstm_decoder_forward.1} parent=1 // pred_check_branch
      %30 = sbr.rel (0) target = $region25
    $region24: #{lstm_decoder_forward.1} parent=1 // pred_region
      %32 = vsyncadd [#allocation3], 0
      %s33 = sshll.u32 %s5, 4
      %s34 = int_to_ptr.hbm [resolvable:$true] %s33
      %s35 = sshll.u32 [#allocation2], 4
      %s36 = int_to_ptr.vmem [resolvable:$true] %s35
      %41 = dma.hbm_to_vmem [thread:$0]  %s34, 4096, %s36, [#allocation3], 256, 256, 16
    $region25: #{lstm_decoder_forward.1} parent=1 // pred_fallthru
      _
    // Predicated region
    $region26: #{lstm_decoder_forward.1} parent=1 // pred_check
      _
    $region27: #{lstm_decoder_forward.1} parent=1 // pred_check_branch
      %43 = sbr.rel (0) target = $region29
    $region28: #{lstm_decoder_forward.1} parent=1 // pred_region
      _
    $region29: #{lstm_decoder_forward.1} parent=1 // pred_fallthru
      _
    // Predicated region
    $region30: #{lstm_decoder_forward.1} parent=1 // pred_check
      _
    $region31: #{lstm_decoder_forward.1} parent=1 // pred_check_branch
      %45 = sbr.rel (0) target = $region33
    $region32: #{lstm_decoder_forward.1} parent=1 // pred_region
      _
    $region33: #{lstm_decoder_forward.1} parent=1 // pred_fallthru
      _
    // Predicated region
    $region34: #{lstm_decoder_forward.1} parent=1 // pred_check
      _
    $region35: #{lstm_decoder_forward.1} parent=1 // pred_check_branch
      %47 = sbr.rel (0) target = $region37
    $region36: #{lstm_decoder_forward.1} parent=1 // pred_region
      _
    $region37: #{lstm_decoder_forward.1} parent=1 // pred_fallthru
      _
    // Predicated region
    $region38: #{lstm_decoder_forward.1} parent=1 // pred_check
      _
    $region39: #{lstm_decoder_forward.1} parent=1 // pred_check_branch
      %49 = sbr.rel (0) target = $region41
    $region40: #{lstm_decoder_forward.1} parent=1 // pred_region
      %51 = dma.done [#allocation3], 4096
    $region41: #{lstm_decoder_forward.1} parent=1 // pred_fallthru
      _
    %v53 = vld [vmem:[%s1] sm:$0xff]
    %v54 = vpack.c.bf16 %v53, %v53
    %v55 = vld [vmem:[#allocation2] sm:$0xff]
    %v56 = vld [vmem:[#allocation2 + $0x8] sm:$0xff]
    %v57 = vld [vmem:[#allocation2 + $0x10] sm:$0xff]
    %v58 = vld [vmem:[#allocation2 + $0x18] sm:$0xff]
    %v59 = vld [vmem:[#allocation2 + $0x20] sm:$0xff]
    %v60 = vld [vmem:[#allocation2 + $0x28] sm:$0xff]
    %v61 = vld [vmem:[#allocation2 + $0x30] sm:$0xff]
    %v62 = vld [vmem:[#allocation2 + $0x38] sm:$0xff]
    %v63 = vld [vmem:[#allocation2 + $0x40] sm:$0xff]
    %v64 = vld [vmem:[#allocation2 + $0x48] sm:$0xff]
    %v65 = vld [vmem:[#allocation2 + $0x50] sm:$0xff]
    %v66 = vld [vmem:[#allocation2 + $0x58] sm:$0xff]
    %v67 = vld [vmem:[#allocation2 + $0x60] sm:$0xff]
    %v68 = vld [vmem:[#allocation2 + $0x68] sm:$0xff]
    %v69 = vld [vmem:[#allocation2 + $0x70] sm:$0xff]
    %v70 = vld [vmem:[#allocation2 + $0x78] sm:$0xff]
    %v71 = vld [vmem:[#allocation2 + $0x80] sm:$0xff]
    %v72 = vld [vmem:[#allocation2 + $0x88] sm:$0xff]
    %v73 = vld [vmem:[#allocation2 + $0x90] sm:$0xff]
    %v74 = vld [vmem:[#allocation2 + $0x98] sm:$0xff]
    %v75 = vld [vmem:[#allocation2 + $0xa0] sm:$0xff]
    %v76 = vld [vmem:[#allocation2 + $0xa8] sm:$0xff]
    %v77 = vld [vmem:[#allocation2 + $0xb0] sm:$0xff]
    %v78 = vld [vmem:[#allocation2 + $0xb8] sm:$0xff]
    %v79 = vld [vmem:[#allocation2 + $0xc0] sm:$0xff]
    %v80 = vld [vmem:[#allocation2 + $0xc8] sm:$0xff]
    %v81 = vld [vmem:[#allocation2 + $0xd0] sm:$0xff]
    %v82 = vld [vmem:[#allocation2 + $0xd8] sm:$0xff]
    %v83 = vld [vmem:[#allocation2 + $0xe0] sm:$0xff]
    %v84 = vld [vmem:[#allocation2 + $0xe8] sm:$0xff]
    %v85 = vld [vmem:[#allocation2 + $0xf0] sm:$0xff]
    %v86 = vld [vmem:[#allocation2 + $0xf8] sm:$0xff]
    %v119 = vunpack.c.l.b16 %v55
    %v120 = vunpack.c.h.b16 %v55
    %v121 = vunpack.c.l.b16 %v56
    %v122 = vunpack.c.h.b16 %v56
    %v123 = vunpack.c.l.b16 %v57
    %v124 = vunpack.c.h.b16 %v57
    %v125 = vunpack.c.l.b16 %v58
    %v126 = vunpack.c.h.b16 %v58
    %v127 = vunpack.c.l.b16 %v59
    %v128 = vunpack.c.h.b16 %v59
    %v129 = vunpack.c.l.b16 %v60
    %v130 = vunpack.c.h.b16 %v60
    %v131 = vunpack.c.l.b16 %v61
    %v132 = vunpack.c.h.b16 %v61
    %v133 = vunpack.c.l.b16 %v62
    %v134 = vunpack.c.h.b16 %v62
    %v135 = vunpack.c.l.b16 %v63
    %v136 = vunpack.c.h.b16 %v63
    %v137 = vunpack.c.l.b16 %v64
    %v138 = vunpack.c.h.b16 %v64
    %v139 = vunpack.c.l.b16 %v65
    %v140 = vunpack.c.h.b16 %v65
    %v141 = vunpack.c.l.b16 %v66
    %v142 = vunpack.c.h.b16 %v66
    %v143 = vunpack.c.l.b16 %v67
    %v144 = vunpack.c.h.b16 %v67
    %v145 = vunpack.c.l.b16 %v68
    %v146 = vunpack.c.h.b16 %v68
    %v147 = vunpack.c.l.b16 %v69
    %v148 = vunpack.c.h.b16 %v69
    %v149 = vunpack.c.l.b16 %v70
    %v150 = vunpack.c.h.b16 %v70
    %v151 = vunpack.c.l.b16 %v71
    %v152 = vunpack.c.h.b16 %v71
    %v153 = vunpack.c.l.b16 %v72
    %v154 = vunpack.c.h.b16 %v72
    %v155 = vunpack.c.l.b16 %v73
    %v156 = vunpack.c.h.b16 %v73
    %v157 = vunpack.c.l.b16 %v74
    %v158 = vunpack.c.h.b16 %v74
    %v159 = vunpack.c.l.b16 %v75
    %v160 = vunpack.c.h.b16 %v75
    %v161 = vunpack.c.l.b16 %v76
    %v162 = vunpack.c.h.b16 %v76
    %v163 = vunpack.c.l.b16 %v77
    %v164 = vunpack.c.h.b16 %v77
    %v165 = vunpack.c.l.b16 %v78
    %v166 = vunpack.c.h.b16 %v78
    %v167 = vunpack.c.l.b16 %v79
    %v168 = vunpack.c.h.b16 %v79
    %v169 = vunpack.c.l.b16 %v80
    %v170 = vunpack.c.h.b16 %v80
    %v171 = vunpack.c.l.b16 %v81
    %v172 = vunpack.c.h.b16 %v81
    %v173 = vunpack.c.l.b16 %v82
    %v174 = vunpack.c.h.b16 %v82
    %v175 = vunpack.c.l.b16 %v83
    %v176 = vunpack.c.h.b16 %v83
    %v177 = vunpack.c.l.b16 %v84
    %v178 = vunpack.c.h.b16 %v84
    %v179 = vunpack.c.l.b16 %v85
    %v180 = vunpack.c.h.b16 %v85
    %v181 = vunpack.c.l.b16 %v86
    %v182 = vunpack.c.h.b16 %v86
    %v183 = vpack.c.b16 %v123, %v119
    %v184 = vpack.c.b16 %v124, %v120
    %v185 = vpack.c.b16 %v125, %v121
    %v186 = vpack.c.b16 %v126, %v122
    %v187 = vpack.c.b16 %v131, %v127
    %v188 = vpack.c.b16 %v132, %v128
    %v189 = vpack.c.b16 %v133, %v129
    %v190 = vpack.c.b16 %v134, %v130
    %v191 = vpack.c.b16 %v139, %v135
    %v192 = vpack.c.b16 %v140, %v136
    %v193 = vpack.c.b16 %v141, %v137
    %v194 = vpack.c.b16 %v142, %v138
    %v195 = vpack.c.b16 %v147, %v143
    %v196 = vpack.c.b16 %v148, %v144
    %v197 = vpack.c.b16 %v149, %v145
    %v198 = vpack.c.b16 %v150, %v146
    %v199 = vpack.c.b16 %v155, %v151
    %v200 = vpack.c.b16 %v156, %v152
    %v201 = vpack.c.b16 %v157, %v153
    %v202 = vpack.c.b16 %v158, %v154
    %v203 = vpack.c.b16 %v163, %v159
    %v204 = vpack.c.b16 %v164, %v160
    %v205 = vpack.c.b16 %v165, %v161
    %v206 = vpack.c.b16 %v166, %v162
    %v207 = vpack.c.b16 %v171, %v167
    %v208 = vpack.c.b16 %v172, %v168
    %v209 = vpack.c.b16 %v173, %v169
    %v210 = vpack.c.b16 %v174, %v170
    %v211 = vpack.c.b16 %v179, %v175
    %v212 = vpack.c.b16 %v180, %v176
    %v213 = vpack.c.b16 %v181, %v177
    %v214 = vpack.c.b16 %v182, %v178
    %247 = vmatpush.bf16.msra.mxu0 %v211
    %248 = vmatpush.bf16.msra.mxu0 %v207
    %249 = vmatpush.bf16.msra.mxu0 %v203
    %250 = vmatpush.bf16.msra.mxu0 %v199
    %251 = vmatpush.bf16.msra.mxu0 %v195
    %252 = vmatpush.bf16.msra.mxu0 %v191
    %253 = vmatpush.bf16.msra.mxu0 %v187
    %254 = vmatpush.bf16.msra.mxu0 %v183
    %255 = vmatmul.bf16.gmra.mxu0 %v54
    %v256 = vpop.f32.mrf.mxu0
    %v257 = vadd.f32 0.0, %v256
    %v258 = vpop.f32.mrf.mxu0
    %259 = vdwg.mxu0
    %260 = vmatpush.bf16.msra.mxu0 %v212
    %261 = vmatpush.bf16.msra.mxu0 %v208
    %262 = vmatpush.bf16.msra.mxu0 %v204
    %263 = vmatpush.bf16.msra.mxu0 %v200
    %264 = vmatpush.bf16.msra.mxu0 %v196
    %265 = vmatpush.bf16.msra.mxu0 %v192
    %266 = vmatpush.bf16.msra.mxu0 %v188
    %267 = vmatpush.bf16.msra.mxu0 %v184
    %268 = vmatmul.bf16.gmra.mxu0 %v54
    %v269 = vpop.f32.mrf.mxu0
    %v270 = vadd.f32 0.0, %v269
    %v271 = vpop.f32.mrf.mxu0
    %272 = vdwg.mxu0
    %273 = vmatpush.bf16.msra.mxu0 %v213
    %274 = vmatpush.bf16.msra.mxu0 %v209
    %275 = vmatpush.bf16.msra.mxu0 %v205
    %276 = vmatpush.bf16.msra.mxu0 %v201
    %277 = vmatpush.bf16.msra.mxu0 %v197
    %278 = vmatpush.bf16.msra.mxu0 %v193
    %279 = vmatpush.bf16.msra.mxu0 %v189
    %280 = vmatpush.bf16.msra.mxu0 %v185
    %281 = vmatmul.bf16.gmra.mxu0 %v54
    %v282 = vpop.f32.mrf.mxu0
    %v283 = vadd.f32 0.0, %v282
    %v284 = vpop.f32.mrf.mxu0
    %285 = vdwg.mxu0
    %286 = vmatpush.bf16.msra.mxu0 %v214
    %287 = vmatpush.bf16.msra.mxu0 %v210
    %288 = vmatpush.bf16.msra.mxu0 %v206
    %289 = vmatpush.bf16.msra.mxu0 %v202
    %290 = vmatpush.bf16.msra.mxu0 %v198
    %291 = vmatpush.bf16.msra.mxu0 %v194
    %292 = vmatpush.bf16.msra.mxu0 %v190
    %293 = vmatpush.bf16.msra.mxu0 %v186
    %294 = vmatmul.bf16.gmra.mxu0 %v54
    %v295 = vpop.f32.mrf.mxu0
    %v296 = vadd.f32 0.0, %v295
    %v297 = vpop.f32.mrf.mxu0
    %298 = vdwg.mxu0
    %v299 = vld [vmem:[%s2] sm:$0xff]
    %v300 = vlaneseq
    %v301 = vand.u32 %v300, 127
    %vm302 = vcmp.ge.s32.totalorder %v301, 64
    %vm303 = vcmp.lt.s32.totalorder %v301, 96
    %vm304 = vmand %vm302, %vm303
    %v305 = vsel %vm304, 1.0, 0.5
    %v306 = vsel %vm304, 0.0, 0.5
    %v307 = vld [vmem:[%s0] sm:$0xff]
    %v308 = vld [vmem:[%s3] sm:$0xf]
    %v309 = vld [vmem:[%s3 + $0x4] sm:$0xf]
    %v310 = vpack.c.bf16 %v307, %v307
    %v313 = vunpack.c.l.b16 %v308
    %v314 = vunpack.c.l.b16 %v309
    %v315 = vpack.c.b16 %v314, %v313
    %vm317 = vcmask 130048
    %v319 = vsel %vm317, %v310, 0
    %321 = vmatpush.bf16.msra.mxu0 0
    %322 = vmatpush.bf16.msra.mxu0 0
    %323 = vmatpush.bf16.msra.mxu0 0
    %324 = vmatpush.bf16.msra.mxu0 0
    %325 = vmatpush.bf16.msra.mxu0 0
    %326 = vmatpush.bf16.msra.mxu0 0
    %327 = vmatpush.bf16.msra.mxu0 0
    %328 = vmatpush.bf16.msra.mxu0 %v315
    %329 = vmatmul.bf16.gmra.mxu0 %v319
    %v330 = vpop.f32.mrf.mxu0
    %v331 = vadd.f32 %v257, %v330
    %v332 = vpop.f32.mrf.mxu0
    %333 = vdwg.mxu0
    %v334 = vld [vmem:[%s6] sm:$0x1]
    %v336 = vperm.slane %v334, 0
    %v338 = vadd.f32 %v331, %v336
    %v339 = vmul.f32 %v338, %v305
    %v340 = vtanh.pop %v339
    %v341 = vmul.f32 %v340, %v305
    %v342 = vadd.f32 %v341, %v306
    %344 = vrot.lane.b32.xlu0 %v299, 32
    %v345 = vpop.permute.xlu0 %344
    %v347 = vmul.f32 %v342, %v345
    %349 = vrot.lane.b32.xlu0 %v342, 64
    %v350 = vpop.permute.xlu0 %349
    %v352 = vmul.f32 %v342, %v350
    %354 = vrot.lane.b32.xlu0 %v352, 32
    %v355 = vpop.permute.xlu0 %354
    %v357 = vadd.f32 %v347, %v355
    %v358 = vtanh.pop %v357
    %360 = vrot.lane.b32.xlu0 %v358, 64
    %v361 = vpop.permute.xlu0 %360
    %v363 = vmul.f32 %v342, %v361
    %v364 = vld [vmem:[%s4] sm:$0xf]
    %v365 = vld [vmem:[%s4 + $0x4] sm:$0xf]
    %v366 = vld [vmem:[%s4 + $0x8] sm:$0xf]
    %v367 = vld [vmem:[%s4 + $0xc] sm:$0xf]
    %v368 = vpack.c.bf16 %v363, %v363
    %370 = vrot.lane.b32.xlu0 %v368, 32
    %v371 = vpop.permute.xlu0 %370
    %v376 = vunpack.c.l.b16 %v364
    %v377 = vunpack.c.l.b16 %v365
    %v378 = vunpack.c.l.b16 %v366
    %v379 = vunpack.c.l.b16 %v367
    %v380 = vpack.c.b16 %v377, %v376
    %v381 = vpack.c.b16 %v379, %v378
    %vm384 = vcmask 261120
    %v386 = vsel %vm384, %v371, 0
    %388 = vmatpush.bf16.msra.mxu0 0
    %389 = vmatpush.bf16.msra.mxu0 0
    %390 = vmatpush.bf16.msra.mxu0 0
    %391 = vmatpush.bf16.msra.mxu0 0
    %392 = vmatpush.bf16.msra.mxu0 0
    %393 = vmatpush.bf16.msra.mxu0 0
    %394 = vmatpush.bf16.msra.mxu0 %v381
    %395 = vmatpush.bf16.msra.mxu0 %v380
    %396 = vmatmul.bf16.gmra.mxu0 %v386
    %v397 = vpop.f32.mrf.mxu0
    %v398 = vadd.f32 %v270, %v397
    %v399 = vpop.f32.mrf.mxu0
    %400 = vdwg.mxu0
    %s401 = scalar_lea.vmem %s6, 1
    %v402 = vld [vmem:[%s401] sm:$0x1]
    %v404 = vperm.slane %v402, 0
    %v406 = vadd.f32 %v398, %v404
    %v407 = vmul.f32 %v406, %v305
    %v408 = vtanh.pop %v407
    %v409 = vmul.f32 %v408, %v305
    %v410 = vadd.f32 %v409, %v306
    %v411 = vmul.f32 %v410, %v299
    %413 = vrot.lane.b32.xlu0 %v410, 64
    %v414 = vpop.permute.xlu0 %413
    %v416 = vmul.f32 %v410, %v414
    %418 = vrot.lane.b32.xlu0 %v416, 32
    %v419 = vpop.permute.xlu0 %418
    %v421 = vadd.f32 %v411, %v419
    %v422 = vtanh.pop %v421
    %424 = vrot.lane.b32.xlu0 %v422, 64
    %v425 = vpop.permute.xlu0 %424
    %v427 = vmul.f32 %v410, %v425
    %s428 = scalar_lea.vmem %s4, 16
    %v429 = vld [vmem:[%s428] sm:$0xf]
    %v430 = vld [vmem:[%s428 + $0x4] sm:$0xf]
    %v431 = vld [vmem:[%s428 + $0x8] sm:$0xf]
    %v432 = vld [vmem:[%s428 + $0xc] sm:$0xf]
    %v433 = vpack.c.bf16 %v427, %v427
    %435 = vrot.lane.b32.xlu0 %v433, 32
    %v436 = vpop.permute.xlu0 %435
    %v441 = vunpack.c.l.b16 %v429
    %v442 = vunpack.c.l.b16 %v430
    %v443 = vunpack.c.l.b16 %v431
    %v444 = vunpack.c.l.b16 %v432
    %v445 = vpack.c.b16 %v442, %v441
    %v446 = vpack.c.b16 %v444, %v443
    %v450 = vsel %vm384, %v436, 0
    %452 = vmatpush.bf16.msra.mxu0 0
    %453 = vmatpush.bf16.msra.mxu0 0
    %454 = vmatpush.bf16.msra.mxu0 0
    %455 = vmatpush.bf16.msra.mxu0 0
    %456 = vmatpush.bf16.msra.mxu0 0
    %457 = vmatpush.bf16.msra.mxu0 0
    %458 = vmatpush.bf16.msra.mxu0 %v446
    %459 = vmatpush.bf16.msra.mxu0 %v445
    %460 = vmatmul.bf16.gmra.mxu0 %v450
    %v461 = vpop.f32.mrf.mxu0
    %v462 = vadd.f32 %v283, %v461
    %v463 = vpop.f32.mrf.mxu0
    %464 = vdwg.mxu0
    %s465 = scalar_lea.vmem %s6, 2
    %v466 = vld [vmem:[%s465] sm:$0x1]
    %v468 = vperm.slane %v466, 0
    %v470 = vadd.f32 %v462, %v468
    %v471 = vmul.f32 %v470, %v305
    %v472 = vtanh.pop %v471
    %v473 = vmul.f32 %v472, %v305
    %v474 = vadd.f32 %v473, %v306
    %475 = vrot.lane.b32.xlu0 %v299, 96
    %v476 = vpop.permute.xlu0 %475
    %v478 = vmul.f32 %v474, %v476
    %480 = vrot.lane.b32.xlu0 %v474, 64
    %v481 = vpop.permute.xlu0 %480
    %v483 = vmul.f32 %v474, %v481
    %485 = vrot.lane.b32.xlu0 %v483, 32
    %v486 = vpop.permute.xlu0 %485
    %v488 = vadd.f32 %v478, %v486
    %v489 = vtanh.pop %v488
    %491 = vrot.lane.b32.xlu0 %v489, 64
    %v492 = vpop.permute.xlu0 %491
    %v494 = vmul.f32 %v474, %v492
    %s495 = scalar_lea.vmem %s4, 32
    %v496 = vld [vmem:[%s495] sm:$0xf]
    %v497 = vld [vmem:[%s495 + $0x4] sm:$0xf]
    %v498 = vld [vmem:[%s495 + $0x8] sm:$0xf]
    %v499 = vld [vmem:[%s495 + $0xc] sm:$0xf]
    %v500 = vpack.c.bf16 %v494, %v494
    %502 = vrot.lane.b32.xlu0 %v500, 32
    %v503 = vpop.permute.xlu0 %502
    %v508 = vunpack.c.l.b16 %v496
    %v509 = vunpack.c.l.b16 %v497
    %v510 = vunpack.c.l.b16 %v498
    %v511 = vunpack.c.l.b16 %v499
    %v512 = vpack.c.b16 %v509, %v508
    %v513 = vpack.c.b16 %v511, %v510
    %v517 = vsel %vm384, %v503, 0
    %519 = vmatpush.bf16.msra.mxu0 0
    %520 = vmatpush.bf16.msra.mxu0 0
    %521 = vmatpush.bf16.msra.mxu0 0
    %522 = vmatpush.bf16.msra.mxu0 0
    %523 = vmatpush.bf16.msra.mxu0 0
    %524 = vmatpush.bf16.msra.mxu0 0
    %525 = vmatpush.bf16.msra.mxu0 %v513
    %526 = vmatpush.bf16.msra.mxu0 %v512
    %527 = vmatmul.bf16.gmra.mxu0 %v517
    %v528 = vpop.f32.mrf.mxu0
    %v529 = vadd.f32 %v296, %v528
    %v530 = vpop.f32.mrf.mxu0
    %531 = vdwg.mxu0
    %s532 = scalar_lea.vmem %s6, 3
    %v533 = vld [vmem:[%s532] sm:$0x1]
    %v535 = vperm.slane %v533, 0
    %v537 = vadd.f32 %v529, %v535
    %v538 = vmul.f32 %v537, %v305
    %v539 = vtanh.pop %v538
    %v540 = vmul.f32 %v539, %v305
    %v541 = vadd.f32 %v540, %v306
    %542 = vrot.lane.b32.xlu0 %v299, 64
    %v543 = vpop.permute.xlu0 %542
    %v545 = vmul.f32 %v541, %v543
    %547 = vrot.lane.b32.xlu0 %v541, 64
    %v548 = vpop.permute.xlu0 %547
    %v550 = vmul.f32 %v541, %v548
    %552 = vrot.lane.b32.xlu0 %v550, 32
    %v553 = vpop.permute.xlu0 %552
    %v555 = vadd.f32 %v545, %v553
    %v556 = vtanh.pop %v555
    %558 = vrot.lane.b32.xlu0 %v556, 64
    %v559 = vpop.permute.xlu0 %558
    %v561 = vmul.f32 %v541, %v559
    %563 = vrot.lane.b32.xlu0 %v363, 32
    %v564 = vpop.permute.xlu0 %563
    %567 = vrot.lane.b32.xlu0 %v427, 64
    %v568 = vpop.permute.xlu0 %567
    %571 = vrot.lane.b32.xlu0 %v494, 96
    %v572 = vpop.permute.xlu0 %571
    %v574 = vsel %vm384, %v564, %v568
    %vm575 = vcmask 523264
    %v576 = vsel %vm575, %v574, %v572
    %vm577 = vcmask 785408
    %v578 = vsel %vm577, %v576, %v561
    %579 = vst [vmem:[%s10] sm:$0xff] %v578
    %581 = vrot.lane.b32.xlu0 %v357, 96
    %v582 = vpop.permute.xlu0 %581
    %585 = vrot.lane.b32.xlu0 %v488, 32
    %v586 = vpop.permute.xlu0 %585
    %589 = vrot.lane.b32.xlu0 %v555, 64
    %v590 = vpop.permute.xlu0 %589
    %v592 = vsel %vm384, %v582, %v421
    %v593 = vsel %vm575, %v592, %v586
    %v594 = vsel %vm577, %v593, %v590
    %595 = vst [vmem:[%s11] sm:$0xff] %v594
    %v596 = vpack.c.bf16 %v561, %v561
    %v597 = vld [vmem:[%s7] sm:$0xf]
    %v598 = vld [vmem:[%s7 + $0x4] sm:$0xf]
    %v599 = vld [vmem:[%s7 + $0x8] sm:$0xf]
    %v600 = vld [vmem:[%s7 + $0xc] sm:$0xf]
    %v601 = vld [vmem:[%s8] sm:$0x1]
    %v603 = vperm.slane %v601, 0
    %606 = vrot.lane.b32.xlu0 %v596, 32
    %v607 = vpop.permute.xlu0 %606
    %v612 = vunpack.c.l.b16 %v597
    %v613 = vunpack.c.l.b16 %v598
    %v614 = vunpack.c.l.b16 %v599
    %v615 = vunpack.c.l.b16 %v600
    %v616 = vpack.c.b16 %v613, %v612
    %v617 = vpack.c.b16 %v615, %v614
    %v621 = vsel %vm384, %v607, 0
    %623 = vmatpush.bf16.msra.mxu0 0
    %624 = vmatpush.bf16.msra.mxu0 0
    %625 = vmatpush.bf16.msra.mxu0 0
    %626 = vmatpush.bf16.msra.mxu0 0
    %627 = vmatpush.bf16.msra.mxu0 0
    %628 = vmatpush.bf16.msra.mxu0 0
    %629 = vmatpush.bf16.msra.mxu0 %v617
    %630 = vmatpush.bf16.msra.mxu0 %v616
    %631 = vmatmul.bf16.gmra.mxu0 %v621
    %v632 = vpop.f32.mrf.mxu0
    %v633 = vadd.f32 %v603, %v632
    %v634 = vpop.f32.mrf.mxu0
    %635 = vdwg.mxu0
    %636 = vst [vmem:[#allocation5] sm:$0xff] %v633
    // Predicated region
    $region42: #{lstm_decoder_forward.1} parent=1 // pred_check
      _
    $region43: #{lstm_decoder_forward.1} parent=1 // pred_check_branch
      %638 = sbr.rel (0) target = $region45
    $region44: #{lstm_decoder_forward.1} parent=1 // pred_region
      %640 = vsyncadd [#allocation4], 0
      %s642 = sshll.u32 [#allocation5], 4
      %s643 = int_to_ptr.vmem [resolvable:$true] %s642
      %s644 = sshll.u32 %s9, 4
      %s645 = int_to_ptr.hbm [resolvable:$true] %s644
      %647 = dma.vmem_to_hbm [thread:$0]  %s643, 128, %s645, [#allocation4]
    $region45: #{lstm_decoder_forward.1} parent=1 // pred_fallthru
      _
    // Predicated region
    $region46: #{lstm_decoder_forward.1} parent=1 // pred_check
      _
    $region47: #{lstm_decoder_forward.1} parent=1 // pred_check_branch
      %649 = sbr.rel (0) target = $region49
    $region48: #{lstm_decoder_forward.1} parent=1 // pred_region
      _
    $region49: #{lstm_decoder_forward.1} parent=1 // pred_fallthru
      _
    // Predicated region
    $region50: #{lstm_decoder_forward.1} parent=1 // pred_check
      _
    $region51: #{lstm_decoder_forward.1} parent=1 // pred_check_branch
      %651 = sbr.rel (0) target = $region53
    $region52: #{lstm_decoder_forward.1} parent=1 // pred_region
      _
    $region53: #{lstm_decoder_forward.1} parent=1 // pred_fallthru
      _
    // Predicated region
    $region54: #{lstm_decoder_forward.1} parent=1 // pred_check
      _
    $region55: #{lstm_decoder_forward.1} parent=1 // pred_check_branch
      %653 = sbr.rel (0) target = $region57
    $region56: #{lstm_decoder_forward.1} parent=1 // pred_region
      %655 = dma.done [#allocation4], 128
    $region57: #{lstm_decoder_forward.1} parent=1 // pred_fallthru
      _
    // Predicated region
    $region58: #{lstm_decoder_forward.1} parent=1 // pred_check
      _
    $region59: #{lstm_decoder_forward.1} parent=1 // pred_check_branch
      %657 = sbr.rel (0) target = $region61
    $region60: #{lstm_decoder_forward.1} parent=1 // pred_region
      _
    $region61: #{lstm_decoder_forward.1} parent=1 // pred_fallthru
      _
    // Predicated region
    $region62: #{lstm_decoder_forward.1} parent=1 // pred_check
      _
    $region63: #{lstm_decoder_forward.1} parent=1 // pred_check_branch
      %659 = sbr.rel (0) target = $region65
    $region64: #{lstm_decoder_forward.1} parent=1 // pred_region
      _
    $region65: #{lstm_decoder_forward.1} parent=1 // pred_fallthru
      _
    %660 = vsyncpa [#allocation3], 1
    %661 = vsyncpa [#allocation4], 1

</llo_original>
